<compile_context>
chip_gen: v6e
topology: v6e:2x2x1
jax: 0.10.0
libtpu: 0.0.40
codegen_flags: <defaults>
</compile_context>

<pallas_src>
import math

import jax
import jax.numpy as jnp
from jax import lax
from jax.experimental import pallas as pl
from jax.experimental.pallas import tpu as pltpu

R_EARTH_KM = 6371.0
DEG2RAD = math.pi / 180.0

_LANES = 128
_PAIR_LANES = 2 * _LANES        # 256 interleaved lon/lat values per slab row
_ROW_ALIGN = 16                 # tiles split into two 8-sublane halves
_DEFAULT_MAX_TILE_ROWS = 1024   # (1024, 256) f32 = 1 MiB per input per buffer


def _round_up(x, m):
    return ((x + m - 1) // m) * m


def _geodesic_loss_kernel(pred_ref, true_ref, out_ref, acc_ref):
    """One (tile_rows, 256) interleaved tile of the haversine reduction.

    pred_ref / true_ref: (tile_rows, 256) f32; lane 2k = lon_k deg, 2k+1 = lat_k deg.
    out_ref:  (1, 1) f32 SMEM per-core partial sum of the atan2 half-terms.
    acc_ref:  (8, 256) f32 VMEM vreg accumulator, persists across the row axis.
    """
    step = pl.program_id(1)

    @pl.when(step == 0)
    def _init():
        acc_ref[...] = jnp.zeros_like(acc_ref)

    tile_rows = pred_ref.shape[0]
    n_lanes = pred_ref.shape[1]            # 256
    half_rows = tile_rows // 2

    lane = lax.broadcasted_iota(jnp.int32, (half_rows, n_lanes), 1)
    even = (lane & 1) == 0

    def half_a(row0):
        """Haversine `a` term for one half-tile; valid at even lanes."""
        yp = pred_ref[pl.ds(row0, half_rows), :]
        yt = true_ref[pl.ds(row0, half_rows), :]
        # sin of the half-angle differences, lon and lat together (deg->rad and
        # the /2 folded into one constant): lane 2k = sin(dlon_k/2),
        # lane 2k+1 = sin(dlat_k/2).  No wasted EUP lanes.
        s = jnp.sin((yt - yp) * jnp.float32(0.5 * DEG2RAD))
        s2 = s * s
        # Pack lat1/lat2 into a single 256-lane cos issue:
        # lane 2k <- lat1_k (pred odd lane), lane 2k+1 <- lat2_k (true odd lane).
        lat = jnp.where(even, pltpu.roll(yp, shift=n_lanes - 1, axis=1), yt)
        cos_lat = jnp.cos(lat * jnp.float32(DEG2RAD))
        # lane 2k: cos(lat1_k) * cos(lat2_k)
        cos_prod = cos_lat * pltpu.roll(cos_lat, shift=n_lanes - 1, axis=1)
        # lane 2k: sin^2(dlat/2) + cos(lat1) cos(lat2) sin^2(dlon/2)
        return pltpu.roll(s2, shift=n_lanes - 1, axis=1) + cos_prod * s2

    a_top = half_a(0)
    a_bot = half_a(half_rows)
    # Pack the two halves' even-lane results into one fully dense vector so the
    # sqrt/sqrt/atan2 tail does no wasted EUP work:
    # lane 2k = a(top point k), lane 2k+1 = a(bottom point k).
    a = jnp.where(even, a_top, pltpu.roll(a_bot, shift=1, axis=1))
    # fp rounding can push `a` a few ULPs above 1.0 -> sqrt(1 - a) would NaN.
    a = jnp.clip(a, 0.0, 1.0)
    # Keep atan2 (not arcsin(sqrt(a))): identical in exact math, but arcsin is
    # ill-conditioned for near-antipodal pairs and would drift from the
    # PyTorch reference there.
    half_c = jnp.arctan2(jnp.sqrt(a), jnp.sqrt(1.0 - a))       # c = 2 * half_c

    # Pure VPU vreg accumulation; the cross-lane reduce happens once, below.
    acc_ref[...] += half_c.reshape(half_rows // 8, 8, n_lanes).sum(axis=0)

    @pl.when(step == pl.num_programs(1) - 1)
    def _finalize():
        out_ref[0, 0] = jnp.sum(acc_ref[...])


def geodesic_loss(y_pred, y_true, *, max_tile_rows=_DEFAULT_MAX_TILE_ROWS):
    """Pallas TPU implementation of GeodesicLoss.forward. Returns a scalar (km)."""
    assert y_pred.shape == y_true.shape and y_pred.shape[-1] == 2
    assert max_tile_rows % _ROW_ALIGN == 0
    B = y_pred.shape[0]
    assert B > 0, "GeodesicLoss over an empty batch is undefined"

    # Row / tile / core geometry.  Each slab row holds 128 interleaved points.
    rows = _round_up(pl.cdiv(B, _LANES), _ROW_ALIGN)
    ncores = 2 if rows >= 2 * _ROW_ALIGN else 1          # v7x has 2 TensorCores
    rows_per_core = _round_up(pl.cdiv(rows, ncores), _ROW_ALIGN)
    tile_rows = min(max_tile_rows, rows_per_core)
    steps_per_core = pl.cdiv(rows_per_core, tile_rows)
    rows_padded = ncores * steps_per_core * tile_rows
    padded_b = rows_padded * _LANES

    def prep(y):
        # Zero-copy bitcast view of the row-major [B, 2] input as (rows, 256);
        # only the ragged tail is zero-padded (zeros contribute exactly 0).
        flat = y.astype(jnp.float32).reshape(-1)
        if padded_b != B:
            flat = jnp.pad(flat, (0, 2 * (padded_b - B)))
        return flat.reshape(rows_padded, _PAIR_LANES)

    pred = prep(y_pred)
    true = prep(y_true)

    block = pl.BlockSpec((tile_rows, _PAIR_LANES),
                         lambda c, i: (c * steps_per_core + i, 0))
    partial = pl.pallas_call(
        _geodesic_loss_kernel,
        out_shape=jax.ShapeDtypeStruct((ncores, 1), jnp.float32),
        grid=(ncores, steps_per_core),
        in_specs=[block, block],
        out_specs=pl.BlockSpec((1, 1), lambda c, i: (c, 0),
                               memory_space=pltpu.MemorySpace.SMEM),
        scratch_shapes=[pltpu.VMEM((8, _PAIR_LANES), jnp.float32)],
        compiler_params=pltpu.CompilerParams(
            # core axis sharded across TensorCores (v7x); row axis is the
            # reduction (output block revisited every step).
            dimension_semantics=("parallel", "arbitrary")),
    )(pred, true)

    # scale = 2 * R / B: the factor 2 of atan2 and the batch mean folded in.
    return jnp.sum(partial) * jnp.float32(2.0 * R_EARTH_KM / B)


def geodesic_loss_ref(y_pred, y_true):
    """Plain-JAX reference mirroring the PyTorch forward exactly."""
    yp = jnp.deg2rad(y_pred.astype(jnp.float32))
    yt = jnp.deg2rad(y_true.astype(jnp.float32))
    lat1, lon1 = yp[:, 1], yp[:, 0]
    lat2, lon2 = yt[:, 1], yt[:, 0]
    dlat = lat2 - lat1
    dlon = lon2 - lon1
    a = jnp.sin(dlat / 2) ** 2 + jnp.cos(lat1) * jnp.cos(lat2) * jnp.sin(dlon / 2) ** 2
    c = 2 * jnp.arctan2(jnp.sqrt(a), jnp.sqrt(1 - a))
    return jnp.mean(c) * R_EARTH_KM


def _random_coords(key, batch):
    # column 0 = longitude in [-180, 180], column 1 = latitude in [-90, 90]
    lo = jnp.array([-180.0, -90.0], dtype=jnp.float32)
    hi = jnp.array([180.0, 90.0], dtype=jnp.float32)
    return jax.random.uniform(key, (batch, 2), jnp.float32) * (hi - lo) + lo


if __name__ == "__main__":
    keys = jax.random.split(jax.random.PRNGKey(0), 8)

    def run_case(kp, kt, batch, **kwargs):
        yp = _random_coords(kp, batch)
        yt = _random_coords(kt, batch)
        out = geodesic_loss(yp, yt, **kwargs)
        jax.block_until_ready(out)
        ref = geodesic_loss_ref(yp, yt)
        # loose tolerance: TPU transcendental (sin/cos/atan2) approximations
        # differ slightly from the reference formulation
        assert jnp.allclose(out, ref, rtol=1e-3, atol=1e-2), (batch, out, ref)

    # Small case: single tile, single core, heavy zero padding.
    run_case(keys[0], keys[1], 8)
    # Row-aligned case: zero-copy (no-pad) input view, 2-core split, grid (2, 1).
    run_case(keys[2], keys[3], 4096)
    # Test-only tiny tile (do NOT ship this config): ragged pad + 2-core split.
    run_case(keys[4], keys[5], 2100, max_tile_rows=16)
    # Multi-step accumulation per core: grid (2, 2) with the tiny test tile.
    run_case(keys[6], keys[7], 5000, max_tile_rows=16)

    print("KERNEL_OK")
</pallas_src>

<mosaic_0001>
module attributes {stable_mosaic.version = 11 : i64} {
  func.func @_geodesic_loss_kernel(%arg0: i32, %arg1: i32, %arg2: memref<16x256xf32, #tpu.memory_space<vmem>>, %arg3: memref<16x256xf32, #tpu.memory_space<vmem>>, %arg4: memref<1x1xf32, #tpu.memory_space<smem>>, %arg5: memref<8x256xf32, #tpu.memory_space<vmem>>) attributes {dimension_semantics = [#tpu.dimension_semantics<parallel>, #tpu.dimension_semantics<arbitrary>], iteration_bounds = array<i64: 1, 1>, scalar_prefetch = 0 : i64, scratch_operands = 1 : i64, tpu.core_type = #tpu.core_type<tc>, window_params = [{transform_indices = @transform_0, window_bounds = array<i64: 16, 256>}, {transform_indices = @transform_1, window_bounds = array<i64: 16, 256>}, {transform_indices = @transform_2, window_bounds = array<i64: 1, 1>}]} {
    %c0_i32 = arith.constant 0 : i32
    %0 = arith.cmpi eq, %arg1, %c0_i32 : i32
    %1 = arith.extui %0 : i1 to i32
    %c0_i32_0 = arith.constant 0 : i32
    %2 = arith.cmpi ne, %1, %c0_i32_0 : i32
    scf.if %2 {
      %cst_27 = arith.constant 0.000000e+00 : f32
      %61 = vector.broadcast %cst_27 : f32 to vector<8x256xf32>
      %c0_28 = arith.constant 0 : index
      %c0_29 = arith.constant 0 : index
      %62 = vector.load %arg5[%c0_28, %c0_29] : memref<8x256xf32, #tpu.memory_space<vmem>>, vector<8x256xf32>
      tpu.vector_store %arg5[%c0_28, %c0_29], %61 {strides = array<i32>} : memref<8x256xf32, #tpu.memory_space<vmem>>, vector<8x256xf32>,
    } else {
    }
    %3 = tpu.iota {dimensions = array<i32: 1>} : vector<8x256xi32>
    %c1_i32 = arith.constant 1 : i32
    %4 = vector.broadcast %c1_i32 : i32 to vector<8x256xi32>
    %5 = arith.andi %3, %4 : vector<8x256xi32>
    %c0_i32_1 = arith.constant 0 : i32
    %6 = vector.broadcast %c0_i32_1 : i32 to vector<8x256xi32>
    %7 = arith.cmpi eq, %5, %6 : vector<8x256xi32>
    %c0 = arith.constant 0 : index
    %c0_2 = arith.constant 0 : index
    %8 = vector.load %arg2[%c0, %c0_2] : memref<16x256xf32, #tpu.memory_space<vmem>>, vector<8x256xf32>
    %c0_3 = arith.constant 0 : index
    %c0_4 = arith.constant 0 : index
    %9 = vector.load %arg3[%c0_3, %c0_4] : memref<16x256xf32, #tpu.memory_space<vmem>>, vector<8x256xf32>
    %10 = arith.subf %9, %8 : vector<8x256xf32>
    %cst = arith.constant 0.00872664619 : f32
    %11 = vector.broadcast %cst : f32 to vector<8x256xf32>
    %12 = arith.mulf %10, %11 : vector<8x256xf32>
    %13 = math.sin %12 : vector<8x256xf32>
    %14 = arith.mulf %13, %13 : vector<8x256xf32>
    %c255_i32 = arith.constant 255 : i32
    %15 = tpu.dynamic_rotate %8 by %c255_i32 dim 1 : vector<8x256xf32>, i32 -> vector<8x256xf32>
    %16 = arith.select %7, %15, %9 : vector<8x256xi1>, vector<8x256xf32>
    %cst_5 = arith.constant 0.0174532924 : f32
    %17 = vector.broadcast %cst_5 : f32 to vector<8x256xf32>
    %18 = arith.mulf %16, %17 : vector<8x256xf32>
    %19 = math.cos %18 : vector<8x256xf32>
    %c255_i32_6 = arith.constant 255 : i32
    %20 = tpu.dynamic_rotate %19 by %c255_i32_6 dim 1 : vector<8x256xf32>, i32 -> vector<8x256xf32>
    %21 = arith.mulf %19, %20 : vector<8x256xf32>
    %c255_i32_7 = arith.constant 255 : i32
    %22 = tpu.dynamic_rotate %14 by %c255_i32_7 dim 1 : vector<8x256xf32>, i32 -> vector<8x256xf32>
    %23 = arith.mulf %21, %14 : vector<8x256xf32>
    %24 = arith.addf %22, %23 : vector<8x256xf32>
    %c8 = arith.constant 8 : index
    %c0_8 = arith.constant 0 : index
    %25 = vector.load %arg2[%c8, %c0_8] : memref<16x256xf32, #tpu.memory_space<vmem>>, vector<8x256xf32>
    %c8_9 = arith.constant 8 : index
    %c0_10 = arith.constant 0 : index
    %26 = vector.load %arg3[%c8_9, %c0_10] : memref<16x256xf32, #tpu.memory_space<vmem>>, vector<8x256xf32>
    %27 = arith.subf %26, %25 : vector<8x256xf32>
    %cst_11 = arith.constant 0.00872664619 : f32
    %28 = vector.broadcast %cst_11 : f32 to vector<8x256xf32>
    %29 = arith.mulf %27, %28 : vector<8x256xf32>
    %30 = math.sin %29 : vector<8x256xf32>
    %31 = arith.mulf %30, %30 : vector<8x256xf32>
    %c255_i32_12 = arith.constant 255 : i32
    %32 = tpu.dynamic_rotate %25 by %c255_i32_12 dim 1 : vector<8x256xf32>, i32 -> vector<8x256xf32>
    %33 = arith.select %7, %32, %26 : vector<8x256xi1>, vector<8x256xf32>
    %cst_13 = arith.constant 0.0174532924 : f32
    %34 = vector.broadcast %cst_13 : f32 to vector<8x256xf32>
    %35 = arith.mulf %33, %34 : vector<8x256xf32>
    %36 = math.cos %35 : vector<8x256xf32>
    %c255_i32_14 = arith.constant 255 : i32
    %37 = tpu.dynamic_rotate %36 by %c255_i32_14 dim 1 : vector<8x256xf32>, i32 -> vector<8x256xf32>
    %38 = arith.mulf %36, %37 : vector<8x256xf32>
    %c255_i32_15 = arith.constant 255 : i32
    %39 = tpu.dynamic_rotate %31 by %c255_i32_15 dim 1 : vector<8x256xf32>, i32 -> vector<8x256xf32>
    %40 = arith.mulf %38, %31 : vector<8x256xf32>
    %41 = arith.addf %39, %40 : vector<8x256xf32>
    %c1_i32_16 = arith.constant 1 : i32
    %42 = tpu.dynamic_rotate %41 by %c1_i32_16 dim 1 : vector<8x256xf32>, i32 -> vector<8x256xf32>
    %43 = arith.select %7, %24, %42 : vector<8x256xi1>, vector<8x256xf32>
    %cst_17 = arith.constant 0.000000e+00 : f32
    %cst_18 = arith.constant 1.000000e+00 : f32
    %44 = vector.broadcast %cst_17 : f32 to vector<8x256xf32>
    %45 = arith.maximumf %44, %43 : vector<8x256xf32>
    %46 = vector.broadcast %cst_18 : f32 to vector<8x256xf32>
    %47 = arith.minimumf %46, %45 : vector<8x256xf32>
    %48 = math.sqrt %47 : vector<8x256xf32>
    %cst_19 = arith.constant 1.000000e+00 : f32
    %49 = vector.broadcast %cst_19 : f32 to vector<8x256xf32>
    %50 = arith.subf %49, %47 : vector<8x256xf32>
    %51 = math.sqrt %50 : vector<8x256xf32>
    %52 = math.atan2 %48, %51 : vector<8x256xf32>
    %c0_20 = arith.constant 0 : index
    %c0_21 = arith.constant 0 : index
    %53 = vector.load %arg5[%c0_20, %c0_21] : memref<8x256xf32, #tpu.memory_space<vmem>>, vector<8x256xf32>
    %54 = vector.shape_cast %52 : vector<8x256xf32> to vector<1x8x256xf32>
    %cst_22 = arith.constant dense<0.000000e+00> : vector<8x256xf32>
    %55 = vector.multi_reduction <add>, %54, %cst_22 [0] : vector<1x8x256xf32> to vector<8x256xf32>
    %56 = arith.addf %53, %55 : vector<8x256xf32>
    %c0_23 = arith.constant 0 : index
    %c0_24 = arith.constant 0 : index
    %57 = vector.load %arg5[%c0_23, %c0_24] : memref<8x256xf32, #tpu.memory_space<vmem>>, vector<8x256xf32>
    tpu.vector_store %arg5[%c0_23, %c0_24], %56 {strides = array<i32>} : memref<8x256xf32, #tpu.memory_space<vmem>>, vector<8x256xf32>,
    %c0_i32_25 = arith.constant 0 : i32
    %58 = arith.cmpi eq, %arg1, %c0_i32_25 : i32
    %59 = arith.extui %58 : i1 to i32
    %c0_i32_26 = arith.constant 0 : i32
    %60 = arith.cmpi ne, %59, %c0_i32_26 : i32
    scf.if %60 {
      %c0_27 = arith.constant 0 : index
      %c0_28 = arith.constant 0 : index
      %61 = vector.load %arg5[%c0_27, %c0_28] : memref<8x256xf32, #tpu.memory_space<vmem>>, vector<8x256xf32>
      %62 = vector.shape_cast %61 : vector<8x256xf32> to vector<1x8x256xf32>
      %cst_29 = arith.constant dense<0.000000e+00> : vector<1xf32>
      %63 = vector.multi_reduction <add>, %62, %cst_29 [1, 2] : vector<1x8x256xf32> to vector<1xf32>
      %64 = vector.shape_cast %63 : vector<1xf32> to vector<1x1x1xf32>
      %65 = vector.extract %64[0, 0, 0] : f32 from vector<1x1x1xf32>
      %c0_30 = arith.constant 0 : index
      %c0_31 = arith.constant 0 : index
      %66 = memref.load %arg4[%c0_30, %c0_31] : memref<1x1xf32, #tpu.memory_space<smem>>
      memref.store %65, %arg4[%c0_30, %c0_31] : memref<1x1xf32, #tpu.memory_space<smem>>
    } else {
    }
    return
  }
  func.func @transform_0(%arg0: i32, %arg1: i32) -> (i32, i32) {
    %c1_i32 = arith.constant 1 : i32
    %0 = arith.muli %arg0, %c1_i32 : i32
    %1 = arith.addi %0, %arg1 : i32
    %c0_i32 = arith.constant 0 : i32
    %c0_i32_0 = arith.constant 0 : i32
    return %1, %c0_i32 : i32, i32
  }
  func.func @transform_1(%arg0: i32, %arg1: i32) -> (i32, i32) {
    %c1_i32 = arith.constant 1 : i32
    %0 = arith.muli %arg0, %c1_i32 : i32
    %1 = arith.addi %0, %arg1 : i32
    %c0_i32 = arith.constant 0 : i32
    %c0_i32_0 = arith.constant 0 : i32
    return %1, %c0_i32 : i32, i32
  }
  func.func @transform_2(%arg0: i32, %arg1: i32) -> (i32, i32) {
    %c0_i32 = arith.constant 0 : i32
    %c0_i32_0 = arith.constant 0 : i32
    return %arg0, %c0_i32 : i32, i32
  }
}

</mosaic_0001>

<llo_original>
// kernel: tpu_custom_call.1
$region0: #{tpu_custom_call.1}
  #allocation0 [shape = 'u32[]', space=smem, size = 0x4, offset = 0x4, fixed_abs, tag = 'smem constant byte address 0x4 - core index']
  #allocation1 [shape = 'u32[144,128]{1,0:T(1,128)}', space=vmem, size = 0x12000, scoped, tag = 'internal scratch']
  #allocation2 [shape = 'f32[8,256]{1,0:T(8,128)}', space=vmem, size = 0x2000, scoped, tag = 'scratch operand']
  %s0 = inlined_call_operand.hbm [shape: f32[16,256], index: 0, kind: input, shape index: {}]
  %s1 = inlined_call_operand.hbm [shape: f32[16,256], index: 1, kind: input, shape index: {}]
  %s2 = inlined_call_operand.hbm [shape: f32[1,1], index: 2, kind: output, shape index: {}]
  %s3 = sld [smem:[#allocation0]]
  $region34: #{tpu_custom_call.1} parent=0
    _
  %s5 = ssub.s32 1, %s3
  %s6 = scalar_select 0, %s5, %s3
  $region1: #{tpu_custom_call.1} parent=0
    #allocation3 [shape = 'u8[16384]{0}', space=vmem, size = 0x4000, scoped, tag = 'input window, operand 0, single buffered']
    #allocation4 [shape = 's32[1]{0}', space=sflag, size = 0x4, scoped, tag = 'scoped memory for tpu_custom_call.1']
    #allocation5 [shape = 's32[1]{0}', space=sflag, size = 0x4, scoped, tag = 'scoped memory for tpu_custom_call.1']
    #allocation6 [shape = 'u8[16384]{0}', space=vmem, size = 0x4000, scoped, tag = 'input window, operand 1, single buffered']
    #allocation7 [shape = 's32[1]{0}', space=sflag, size = 0x4, scoped, tag = 'scoped memory for tpu_custom_call.1']
    #allocation8 [shape = 'u8[512]{0}', space=smem, size = 0x200, scoped, tag = 'output window, operand 0, single buffered']
    %7 = vsyncpa [#allocation4], 0
    %8 = vsyncpa [#allocation7], 0
    %9 = vsyncpa [#allocation5], 0
    // Predicated region
    $region2: #{tpu_custom_call.1} parent=1 // pred_check
      _
    $region3: #{tpu_custom_call.1} parent=1 // pred_check_branch
      %11 = sbr.rel (0) target = $region5
    $region4: #{tpu_custom_call.1} parent=1 // pred_region
      %s12 = sadd.s32 0, 0
      %s13 = smul.u32 2, %s12
      %s15 = ssub.s32 512, 512
      %16 = vsyncadd [#allocation4], %s15
      %s17 = smul.addr %s13, 2
      %s18 = smul.addr %s17, 128
      %s19 = scalar_lea.hbm %s0, %s18
      %s20 = sshll.u32 [#allocation3], 4
      %s21 = int_to_ptr.vmem [resolvable:$true] %s20
      %26 = dma.hbm_to_vmem [thread:$0]  %s19, 512, %s21, [#allocation4], 256, 256, 16
    $region5: #{tpu_custom_call.1} parent=1 // pred_fallthru
      _
    // Predicated region
    $region6: #{tpu_custom_call.1} parent=1 // pred_check
      _
    $region7: #{tpu_custom_call.1} parent=1 // pred_check_branch
      %28 = sbr.rel (0) target = $region9
    $region8: #{tpu_custom_call.1} parent=1 // pred_region
      %s29 = sadd.s32 0, 0
      %s30 = smul.u32 2, %s29
      %s32 = ssub.s32 512, 512
      %33 = vsyncadd [#allocation7], %s32
      %s34 = smul.addr %s30, 2
      %s35 = smul.addr %s34, 128
      %s36 = scalar_lea.hbm %s1, %s35
      %s37 = sshll.u32 [#allocation6], 4
      %s38 = int_to_ptr.vmem [resolvable:$true] %s37
      %43 = dma.hbm_to_vmem [thread:$0]  %s36, 512, %s38, [#allocation7], 256, 256, 16
    $region9: #{tpu_custom_call.1} parent=1 // pred_fallthru
      _
    // Predicated region
    $region10: #{tpu_custom_call.1} parent=1 // pred_check
      _
    $region11: #{tpu_custom_call.1} parent=1 // pred_check_branch
      %45 = sbr.rel (0) target = $region13
    $region12: #{tpu_custom_call.1} parent=1 // pred_region
      %46 = dma.done [#allocation4], 512
    $region13: #{tpu_custom_call.1} parent=1 // pred_fallthru
      _
    // Predicated region
    $region14: #{tpu_custom_call.1} parent=1 // pred_check
      _
    $region15: #{tpu_custom_call.1} parent=1 // pred_check_branch
      %48 = sbr.rel (0) target = $region17
    $region16: #{tpu_custom_call.1} parent=1 // pred_region
      %49 = dma.done [#allocation7], 512
    $region17: #{tpu_custom_call.1} parent=1 // pred_fallthru
      _
    %s50 = sadd.s32 0, 0
    %s51 = smul.u32 2, %s50
    %s52 = sadd.s32 0, 0
    %s53 = smul.u32 2, %s52
    %p54 = scmp.eq.s32.totalorder 0, 0
    // Predicated region
    $region18: #{tpu_custom_call.1} parent=1 // pred_check
      %p55 = pneg %p54
    $region19: #{tpu_custom_call.1} parent=1 // pred_check_branch
      %57 = sbr.rel (%p55) target = $region21
    $region20: #{tpu_custom_call.1} parent=1 // pred_region
      %58 = vst [vmem:[#allocation2] sm:$0xff] 0.0
      %59 = vst [vmem:[#allocation2 + $0x8] sm:$0xff] 0.0
    $region21: #{tpu_custom_call.1} parent=1 // pred_fallthru
      _
    %v60 = vlaneseq
    %v61 = vand.u32 %v60, 127
    %v62 = vadd.s32 %v61, 128
    %v63 = vand.u32 %v61, 1
    %v64 = vand.u32 %v62, 1
    %vm65 = vcmp.eq.s32.totalorder %v63, 0
    %vm66 = vcmp.eq.s32.totalorder %v64, 0
    %v67 = vld [vmem:[#allocation3] sm:$0xff]
    %v68 = vld [vmem:[#allocation3 + $0x8] sm:$0xff]
    %v69 = vld [vmem:[#allocation6] sm:$0xff]
    %v70 = vld [vmem:[#allocation6 + $0x8] sm:$0xff]
    %v71 = vsub.f32 %v69, %v67
    %v72 = vsub.f32 %v70, %v68
    %v73 = vmul.f32 %v71, 0.008726646
    %v74 = vmul.f32 %v72, 0.008726646
    %v75 = vand.u32 2147483647, %v73
    %vm76 = vcmp.le.f32.partialorder %v75, 0.7853982
    %vm77 = vcmp.lt.s32.totalorder %v73, 0
    %v78 = vand.u32 %v73, 2139095040
    %v79 = vshrl.u32 %v78, 23
    %v80 = vsub.s32 %v79, 127
    %v81 = vand.u32 2147483647, %v73
    %v82 = vand.u32 %v81, 8388607
    %v83 = vor.u32 %v82, 8388608
    %v84 = vsub.s32 0, %v83
    %v85 = vadd.s32 %v80, 1
    %vm86 = vcmp.gt.s32.totalorder %v85, 0
    %v87 = vsel %vm86, %v85, 0
    %v88 = vshrl.u32 %v87, 5
    %v89 = vand.u32 %v87, 31
    %v90 = vsub.s32 32, %v89
    %v91 = vshrl.u32 683565275, %v90
    %v92 = vshll.u32 683565275, %v89
    %v93 = vshrl.u32 2475754826, %v90
    %v94 = vor.u32 %v92, %v93
    %v95 = vshll.u32 2475754826, %v89
    %v96 = vshrl.u32 2131351028, %v90
    %v97 = vor.u32 %v95, %v96
    %v98 = vshll.u32 2131351028, %v89
    %v99 = vshrl.u32 2102212464, %v90
    %v100 = vor.u32 %v98, %v99
    %v101 = vshll.u32 2102212464, %v89
    %v102 = vshrl.u32 920167782, %v90
    %v103 = vor.u32 %v101, %v102
    %v104 = vshll.u32 920167782, %v89
    %v105 = vshrl.u32 1326507024, %v90
    %v106 = vor.u32 %v104, %v105
    %vm107 = vcmp.lt.s32.totalorder %v88, 1
    %vm108 = vcmp.lt.s32.totalorder %v88, 2
    %vm109 = vcmp.lt.s32.totalorder %v88, 3
    %vm110 = vcmp.lt.s32.totalorder %v88, 4
    %v111 = vsel %vm107, %v91, %v94
    %v112 = vsel %vm110, %v100, 2102212464
    %v113 = vsel %vm109, %v97, %v112
    %v114 = vsel %vm108, %v111, %v113
    %v115 = vsel %vm107, %v94, %v97
    %v116 = vsel %vm110, %v103, 920167782
    %v117 = vsel %vm109, %v100, %v116
    %v118 = vsel %vm108, %v115, %v117
    %v119 = vsel %vm107, %v97, %v100
    %v120 = vsel %vm110, %v106, 1326507024
    %v121 = vsel %vm109, %v103, %v120
    %v122 = vsel %vm108, %v119, %v121
    %v123 = vshll.u32 %v83, 8
    %v124 = vmul.u32.u64.compose %v123, %v122
    %v125 = vextract.low.u32 %v124
    %v126 = vextract.high.u32 %v124
    %v127 = vmul.u32.u64.compose %v123, %v118
    %v128 = vextract.low.u32 %v127
    %v129 = vextract.high.u32 %v127
    %v130 = vmul.u32 %v123, %v114
    %v131 = vadd.s32 %v126, %v128
    %vm132 = vc.u32 %v126, %v128
    %v133 = vadd.s32 %v129, 1
    %v134 = vsel %vm132, %v133, %v129
    %v135 = vadd.s32 %v130, %v134
    %v136 = vadd.s32 %v135, 536870912
    %v137 = vshrl.u32 %v136, 30
    %v138 = vshll.u32 %v137, 30
    %v139 = vsub.s32 %v135, %v138
    %vm140 = vcmp.lt.s32.totalorder %v139, 0
    %v141 = vsub.s32 0, %v139
    %v142 = vsel %vm140, %v141, %v139
    %v143 = vclz %v142
    %v144 = vsub.s32 %v143, 2
    %vm145 = vcmp.gt.s32.totalorder 0, %v144
    %v146 = vsel %vm145, 0, %v144
    %v147 = vsub.s32 32, %v146
    %v148 = vshll.u32 %v139, %v146
    %v149 = vshrl.u32 %v131, %v147
    %v150 = vor.u32 %v148, %v149
    %v151 = vsub.s32 4294967266, %v146
    %v152 = vadd.s32 %v151, 127
    %v153 = vshll.u32 %v152, 23
    %v154 = vor.u32 4788187, %v153
    %v155 = vand.u32 2147483647, %v154
    %v157 = vcvt.s32.f32 %v150
    %v158 = vmul.f32 %v157, %v155
    %v159 = vxor.u32 %v158, 2147483648
    %v160 = vsel %vm77, %v159, %v158
    %v161 = vsub.s32 4, %v137
    %v162 = vsel %vm77, %v161, %v137
    %v163 = vsel %vm76, %v73, %v160
    %v164 = vsel %vm76, 0, %v162
    %v165 = vcosq.f32.pop %v163
    %v166 = vsinq.f32.pop %v163
    %vm167 = vweird.f32 %v73
    %v168 = vadd.s32 %v164, 3
    %v169 = vand.u32 %v168, 3
    %vm170 = vcmp.lt.s32.totalorder %v169, 2
    %vm171 = vcmp.eq.s32.totalorder %v169, 0
    %v172 = vxor.u32 %v166, 2147483648
    %v173 = vsel %vm171, %v165, %v172
    %vm174 = vcmp.eq.s32.totalorder %v169, 2
    %v175 = vxor.u32 %v165, 2147483648
    %v176 = vsel %vm174, %v175, %v166
    %v177 = vsel %vm170, %v173, %v176
    %v178 = vsel %vm167, nan, %v177
    %v179 = vand.u32 2147483647, %v74
    %vm180 = vcmp.le.f32.partialorder %v179, 0.7853982
    %vm181 = vcmp.lt.s32.totalorder %v74, 0
    %v182 = vand.u32 %v74, 2139095040
    %v183 = vshrl.u32 %v182, 23
    %v184 = vsub.s32 %v183, 127
    %v185 = vand.u32 2147483647, %v74
    %v186 = vand.u32 %v185, 8388607
    %v187 = vor.u32 %v186, 8388608
    %v188 = vsub.s32 0, %v187
    %v189 = vadd.s32 %v184, 1
    %vm190 = vcmp.gt.s32.totalorder %v189, 0
    %v191 = vsel %vm190, %v189, 0
    %v192 = vshrl.u32 %v191, 5
    %v193 = vand.u32 %v191, 31
    %v194 = vsub.s32 32, %v193
    %v195 = vshrl.u32 683565275, %v194
    %v196 = vshll.u32 683565275, %v193
    %v197 = vshrl.u32 2475754826, %v194
    %v198 = vor.u32 %v196, %v197
    %v199 = vshll.u32 2475754826, %v193
    %v200 = vshrl.u32 2131351028, %v194
    %v201 = vor.u32 %v199, %v200
    %v202 = vshll.u32 2131351028, %v193
    %v203 = vshrl.u32 2102212464, %v194
    %v204 = vor.u32 %v202, %v203
    %v205 = vshll.u32 2102212464, %v193
    %v206 = vshrl.u32 920167782, %v194
    %v207 = vor.u32 %v205, %v206
    %v208 = vshll.u32 920167782, %v193
    %v209 = vshrl.u32 1326507024, %v194
    %v210 = vor.u32 %v208, %v209
    %vm211 = vcmp.lt.s32.totalorder %v192, 1
    %vm212 = vcmp.lt.s32.totalorder %v192, 2
    %vm213 = vcmp.lt.s32.totalorder %v192, 3
    %vm214 = vcmp.lt.s32.totalorder %v192, 4
    %v215 = vsel %vm211, %v195, %v198
    %v216 = vsel %vm214, %v204, 2102212464
    %v217 = vsel %vm213, %v201, %v216
    %v218 = vsel %vm212, %v215, %v217
    %v219 = vsel %vm211, %v198, %v201
    %v220 = vsel %vm214, %v207, 920167782
    %v221 = vsel %vm213, %v204, %v220
    %v222 = vsel %vm212, %v219, %v221
    %v223 = vsel %vm211, %v201, %v204
    %v224 = vsel %vm214, %v210, 1326507024
    %v225 = vsel %vm213, %v207, %v224
    %v226 = vsel %vm212, %v223, %v225
    %v227 = vshll.u32 %v187, 8
    %v228 = vmul.u32.u64.compose %v227, %v226
    %v229 = vextract.low.u32 %v228
    %v230 = vextract.high.u32 %v228
    %v231 = vmul.u32.u64.compose %v227, %v222
    %v232 = vextract.low.u32 %v231
    %v233 = vextract.high.u32 %v231
    %v234 = vmul.u32 %v227, %v218
    %v235 = vadd.s32 %v230, %v232
    %vm236 = vc.u32 %v230, %v232
    %v237 = vadd.s32 %v233, 1
    %v238 = vsel %vm236, %v237, %v233
    %v239 = vadd.s32 %v234, %v238
    %v240 = vadd.s32 %v239, 536870912
    %v241 = vshrl.u32 %v240, 30
    %v242 = vshll.u32 %v241, 30
    %v243 = vsub.s32 %v239, %v242
    %vm244 = vcmp.lt.s32.totalorder %v243, 0
    %v245 = vsub.s32 0, %v243
    %v246 = vsel %vm244, %v245, %v243
    %v247 = vclz %v246
    %v248 = vsub.s32 %v247, 2
    %vm249 = vcmp.gt.s32.totalorder 0, %v248
    %v250 = vsel %vm249, 0, %v248
    %v251 = vsub.s32 32, %v250
    %v252 = vshll.u32 %v243, %v250
    %v253 = vshrl.u32 %v235, %v251
    %v254 = vor.u32 %v252, %v253
    %v255 = vsub.s32 4294967266, %v250
    %v256 = vadd.s32 %v255, 127
    %v257 = vshll.u32 %v256, 23
    %v258 = vor.u32 4788187, %v257
    %v259 = vand.u32 2147483647, %v258
    %v261 = vcvt.s32.f32 %v254
    %v262 = vmul.f32 %v261, %v259
    %v263 = vxor.u32 %v262, 2147483648
    %v264 = vsel %vm181, %v263, %v262
    %v265 = vsub.s32 4, %v241
    %v266 = vsel %vm181, %v265, %v241
    %v267 = vsel %vm180, %v74, %v264
    %v268 = vsel %vm180, 0, %v266
    %v269 = vcosq.f32.pop %v267
    %v270 = vsinq.f32.pop %v267
    %vm271 = vweird.f32 %v74
    %v272 = vadd.s32 %v268, 3
    %v273 = vand.u32 %v272, 3
    %vm274 = vcmp.lt.s32.totalorder %v273, 2
    %vm275 = vcmp.eq.s32.totalorder %v273, 0
    %v276 = vxor.u32 %v270, 2147483648
    %v277 = vsel %vm275, %v269, %v276
    %vm278 = vcmp.eq.s32.totalorder %v273, 2
    %v279 = vxor.u32 %v269, 2147483648
    %v280 = vsel %vm278, %v279, %v270
    %v281 = vsel %vm274, %v277, %v280
    %v282 = vsel %vm271, nan, %v281
    %v283 = vmul.f32 %v178, %v178
    %v284 = vmul.f32 %v282, %v282
    %285 = vrot.lane.b32.xlu0 %v67, 127
    %v286 = vpop.permute.xlu0 %285
    %287 = vrot.lane.b32.xlu0 %v68, 127
    %v288 = vpop.permute.xlu0 %287
    %vm289 = vcmp.lt.s32.totalorder %v61, 127
    %v290 = vsel %vm289, %v286, %v288
    %v291 = vsel %vm289, %v288, %v286
    %v292 = vsel %vm65, %v290, %v69
    %v293 = vsel %vm66, %v291, %v70
    %v294 = vmul.f32 %v292, 0.017453292
    %v295 = vmul.f32 %v293, 0.017453292
    %v296 = vand.u32 2147483647, %v294
    %vm297 = vcmp.le.f32.partialorder %v296, 0.7853982
    %vm298 = vcmp.lt.s32.totalorder %v294, 0
    %v299 = vand.u32 %v294, 2139095040
    %v300 = vshrl.u32 %v299, 23
    %v301 = vsub.s32 %v300, 127
    %v302 = vand.u32 2147483647, %v294
    %v303 = vand.u32 %v302, 8388607
    %v304 = vor.u32 %v303, 8388608
    %v305 = vsub.s32 0, %v304
    %v306 = vadd.s32 %v301, 1
    %vm307 = vcmp.gt.s32.totalorder %v306, 0
    %v308 = vsel %vm307, %v306, 0
    %v309 = vshrl.u32 %v308, 5
    %v310 = vand.u32 %v308, 31
    %v311 = vsub.s32 32, %v310
    %v312 = vshrl.u32 683565275, %v311
    %v313 = vshll.u32 683565275, %v310
    %v314 = vshrl.u32 2475754826, %v311
    %v315 = vor.u32 %v313, %v314
    %v316 = vshll.u32 2475754826, %v310
    %v317 = vshrl.u32 2131351028, %v311
    %v318 = vor.u32 %v316, %v317
    %v319 = vshll.u32 2131351028, %v310
    %v320 = vshrl.u32 2102212464, %v311
    %v321 = vor.u32 %v319, %v320
    %v322 = vshll.u32 2102212464, %v310
    %v323 = vshrl.u32 920167782, %v311
    %v324 = vor.u32 %v322, %v323
    %v325 = vshll.u32 920167782, %v310
    %v326 = vshrl.u32 1326507024, %v311
    %v327 = vor.u32 %v325, %v326
    %vm328 = vcmp.lt.s32.totalorder %v309, 1
    %vm329 = vcmp.lt.s32.totalorder %v309, 2
    %vm330 = vcmp.lt.s32.totalorder %v309, 3
    %vm331 = vcmp.lt.s32.totalorder %v309, 4
    %v332 = vsel %vm328, %v312, %v315
    %v333 = vsel %vm331, %v321, 2102212464
    %v334 = vsel %vm330, %v318, %v333
    %v335 = vsel %vm329, %v332, %v334
    %v336 = vsel %vm328, %v315, %v318
    %v337 = vsel %vm331, %v324, 920167782
    %v338 = vsel %vm330, %v321, %v337
    %v339 = vsel %vm329, %v336, %v338
    %v340 = vsel %vm328, %v318, %v321
    %v341 = vsel %vm331, %v327, 1326507024
    %v342 = vsel %vm330, %v324, %v341
    %v343 = vsel %vm329, %v340, %v342
    %v344 = vshll.u32 %v304, 8
    %v345 = vmul.u32.u64.compose %v344, %v343
    %v346 = vextract.low.u32 %v345
    %v347 = vextract.high.u32 %v345
    %v348 = vmul.u32.u64.compose %v344, %v339
    %v349 = vextract.low.u32 %v348
    %v350 = vextract.high.u32 %v348
    %v351 = vmul.u32 %v344, %v335
    %v352 = vadd.s32 %v347, %v349
    %vm353 = vc.u32 %v347, %v349
    %v354 = vadd.s32 %v350, 1
    %v355 = vsel %vm353, %v354, %v350
    %v356 = vadd.s32 %v351, %v355
    %v357 = vadd.s32 %v356, 536870912
    %v358 = vshrl.u32 %v357, 30
    %v359 = vshll.u32 %v358, 30
    %v360 = vsub.s32 %v356, %v359
    %vm361 = vcmp.lt.s32.totalorder %v360, 0
    %v362 = vsub.s32 0, %v360
    %v363 = vsel %vm361, %v362, %v360
    %v364 = vclz %v363
    %v365 = vsub.s32 %v364, 2
    %vm366 = vcmp.gt.s32.totalorder 0, %v365
    %v367 = vsel %vm366, 0, %v365
    %v368 = vsub.s32 32, %v367
    %v369 = vshll.u32 %v360, %v367
    %v370 = vshrl.u32 %v352, %v368
    %v371 = vor.u32 %v369, %v370
    %v372 = vsub.s32 4294967266, %v367
    %v373 = vadd.s32 %v372, 127
    %v374 = vshll.u32 %v373, 23
    %v375 = vor.u32 4788187, %v374
    %v376 = vand.u32 2147483647, %v375
    %v378 = vcvt.s32.f32 %v371
    %v379 = vmul.f32 %v378, %v376
    %v380 = vxor.u32 %v379, 2147483648
    %v381 = vsel %vm298, %v380, %v379
    %v382 = vsub.s32 4, %v358
    %v383 = vsel %vm298, %v382, %v358
    %v384 = vsel %vm297, %v294, %v381
    %v385 = vsel %vm297, 0, %v383
    %v386 = vcosq.f32.pop %v384
    %v387 = vsinq.f32.pop %v384
    %vm388 = vweird.f32 %v294
    %v389 = vand.u32 %v385, 3
    %vm390 = vcmp.lt.s32.totalorder %v389, 2
    %vm391 = vcmp.eq.s32.totalorder %v389, 0
    %v392 = vxor.u32 %v387, 2147483648
    %v393 = vsel %vm391, %v386, %v392
    %vm394 = vcmp.eq.s32.totalorder %v389, 2
    %v395 = vxor.u32 %v386, 2147483648
    %v396 = vsel %vm394, %v395, %v387
    %v397 = vsel %vm390, %v393, %v396
    %v398 = vsel %vm388, nan, %v397
    %v399 = vand.u32 2147483647, %v295
    %vm400 = vcmp.le.f32.partialorder %v399, 0.7853982
    %vm401 = vcmp.lt.s32.totalorder %v295, 0
    %v402 = vand.u32 %v295, 2139095040
    %v403 = vshrl.u32 %v402, 23
    %v404 = vsub.s32 %v403, 127
    %v405 = vand.u32 2147483647, %v295
    %v406 = vand.u32 %v405, 8388607
    %v407 = vor.u32 %v406, 8388608
    %v408 = vsub.s32 0, %v407
    %v409 = vadd.s32 %v404, 1
    %vm410 = vcmp.gt.s32.totalorder %v409, 0
    %v411 = vsel %vm410, %v409, 0
    %v412 = vshrl.u32 %v411, 5
    %v413 = vand.u32 %v411, 31
    %v414 = vsub.s32 32, %v413
    %v415 = vshrl.u32 683565275, %v414
    %v416 = vshll.u32 683565275, %v413
    %v417 = vshrl.u32 2475754826, %v414
    %v418 = vor.u32 %v416, %v417
    %v419 = vshll.u32 2475754826, %v413
    %v420 = vshrl.u32 2131351028, %v414
    %v421 = vor.u32 %v419, %v420
    %v422 = vshll.u32 2131351028, %v413
    %v423 = vshrl.u32 2102212464, %v414
    %v424 = vor.u32 %v422, %v423
    %v425 = vshll.u32 2102212464, %v413
    %v426 = vshrl.u32 920167782, %v414
    %v427 = vor.u32 %v425, %v426
    %v428 = vshll.u32 920167782, %v413
    %v429 = vshrl.u32 1326507024, %v414
    %v430 = vor.u32 %v428, %v429
    %vm431 = vcmp.lt.s32.totalorder %v412, 1
    %vm432 = vcmp.lt.s32.totalorder %v412, 2
    %vm433 = vcmp.lt.s32.totalorder %v412, 3
    %vm434 = vcmp.lt.s32.totalorder %v412, 4
    %v435 = vsel %vm431, %v415, %v418
    %v436 = vsel %vm434, %v424, 2102212464
    %v437 = vsel %vm433, %v421, %v436
    %v438 = vsel %vm432, %v435, %v437
    %v439 = vsel %vm431, %v418, %v421
    %v440 = vsel %vm434, %v427, 920167782
    %v441 = vsel %vm433, %v424, %v440
    %v442 = vsel %vm432, %v439, %v441
    %v443 = vsel %vm431, %v421, %v424
    %v444 = vsel %vm434, %v430, 1326507024
    %v445 = vsel %vm433, %v427, %v444
    %v446 = vsel %vm432, %v443, %v445
    %v447 = vshll.u32 %v407, 8
    %v448 = vmul.u32.u64.compose %v447, %v446
    %v449 = vextract.low.u32 %v448
    %v450 = vextract.high.u32 %v448
    %v451 = vmul.u32.u64.compose %v447, %v442
    %v452 = vextract.low.u32 %v451
    %v453 = vextract.high.u32 %v451
    %v454 = vmul.u32 %v447, %v438
    %v455 = vadd.s32 %v450, %v452
    %vm456 = vc.u32 %v450, %v452
    %v457 = vadd.s32 %v453, 1
    %v458 = vsel %vm456, %v457, %v453
    %v459 = vadd.s32 %v454, %v458
    %v460 = vadd.s32 %v459, 536870912
    %v461 = vshrl.u32 %v460, 30
    %v462 = vshll.u32 %v461, 30
    %v463 = vsub.s32 %v459, %v462
    %vm464 = vcmp.lt.s32.totalorder %v463, 0
    %v465 = vsub.s32 0, %v463
    %v466 = vsel %vm464, %v465, %v463
    %v467 = vclz %v466
    %v468 = vsub.s32 %v467, 2
    %vm469 = vcmp.gt.s32.totalorder 0, %v468
    %v470 = vsel %vm469, 0, %v468
    %v471 = vsub.s32 32, %v470
    %v472 = vshll.u32 %v463, %v470
    %v473 = vshrl.u32 %v455, %v471
    %v474 = vor.u32 %v472, %v473
    %v475 = vsub.s32 4294967266, %v470
    %v476 = vadd.s32 %v475, 127
    %v477 = vshll.u32 %v476, 23
    %v478 = vor.u32 4788187, %v477
    %v479 = vand.u32 2147483647, %v478
    %v481 = vcvt.s32.f32 %v474
    %v482 = vmul.f32 %v481, %v479
    %v483 = vxor.u32 %v482, 2147483648
    %v484 = vsel %vm401, %v483, %v482
    %v485 = vsub.s32 4, %v461
    %v486 = vsel %vm401, %v485, %v461
    %v487 = vsel %vm400, %v295, %v484
    %v488 = vsel %vm400, 0, %v486
    %v489 = vcosq.f32.pop %v487
    %v490 = vsinq.f32.pop %v487
    %vm491 = vweird.f32 %v295
    %v492 = vand.u32 %v488, 3
    %vm493 = vcmp.lt.s32.totalorder %v492, 2
    %vm494 = vcmp.eq.s32.totalorder %v492, 0
    %v495 = vxor.u32 %v490, 2147483648
    %v496 = vsel %vm494, %v489, %v495
    %vm497 = vcmp.eq.s32.totalorder %v492, 2
    %v498 = vxor.u32 %v489, 2147483648
    %v499 = vsel %vm497, %v498, %v490
    %v500 = vsel %vm493, %v496, %v499
    %v501 = vsel %vm491, nan, %v500
    %502 = vrot.lane.b32.xlu0 %v398, 127
    %v503 = vpop.permute.xlu0 %502
    %504 = vrot.lane.b32.xlu0 %v501, 127
    %v505 = vpop.permute.xlu0 %504
    %v506 = vsel %vm289, %v503, %v505
    %v507 = vsel %vm289, %v505, %v503
    %v508 = vmul.f32 %v398, %v506
    %v509 = vmul.f32 %v501, %v507
    %510 = vrot.lane.b32.xlu0 %v283, 127
    %v511 = vpop.permute.xlu0 %510
    %512 = vrot.lane.b32.xlu0 %v284, 127
    %v513 = vpop.permute.xlu0 %512
    %v514 = vsel %vm289, %v511, %v513
    %v515 = vsel %vm289, %v513, %v511
    %v516 = vmul.f32 %v508, %v283
    %v517 = vmul.f32 %v509, %v284
    %v518 = vadd.f32 %v514, %v516
    %v519 = vadd.f32 %v515, %v517
    %v520 = vld [vmem:[#allocation3 + $0x10] sm:$0xff]
    %v521 = vld [vmem:[#allocation3 + $0x18] sm:$0xff]
    %v522 = vld [vmem:[#allocation6 + $0x10] sm:$0xff]
    %v523 = vld [vmem:[#allocation6 + $0x18] sm:$0xff]
    %v524 = vsub.f32 %v522, %v520
    %v525 = vsub.f32 %v523, %v521
    %v526 = vmul.f32 %v524, 0.008726646
    %v527 = vmul.f32 %v525, 0.008726646
    %v528 = vand.u32 2147483647, %v526
    %vm529 = vcmp.le.f32.partialorder %v528, 0.7853982
    %vm530 = vcmp.lt.s32.totalorder %v526, 0
    %v531 = vand.u32 %v526, 2139095040
    %v532 = vshrl.u32 %v531, 23
    %v533 = vsub.s32 %v532, 127
    %v534 = vand.u32 2147483647, %v526
    %v535 = vand.u32 %v534, 8388607
    %v536 = vor.u32 %v535, 8388608
    %v537 = vsub.s32 0, %v536
    %v538 = vadd.s32 %v533, 1
    %vm539 = vcmp.gt.s32.totalorder %v538, 0
    %v540 = vsel %vm539, %v538, 0
    %v541 = vshrl.u32 %v540, 5
    %v542 = vand.u32 %v540, 31
    %v543 = vsub.s32 32, %v542
    %v544 = vshrl.u32 683565275, %v543
    %v545 = vshll.u32 683565275, %v542
    %v546 = vshrl.u32 2475754826, %v543
    %v547 = vor.u32 %v545, %v546
    %v548 = vshll.u32 2475754826, %v542
    %v549 = vshrl.u32 2131351028, %v543
    %v550 = vor.u32 %v548, %v549
    %v551 = vshll.u32 2131351028, %v542
    %v552 = vshrl.u32 2102212464, %v543
    %v553 = vor.u32 %v551, %v552
    %v554 = vshll.u32 2102212464, %v542
    %v555 = vshrl.u32 920167782, %v543
    %v556 = vor.u32 %v554, %v555
    %v557 = vshll.u32 920167782, %v542
    %v558 = vshrl.u32 1326507024, %v543
    %v559 = vor.u32 %v557, %v558
    %vm560 = vcmp.lt.s32.totalorder %v541, 1
    %vm561 = vcmp.lt.s32.totalorder %v541, 2
    %vm562 = vcmp.lt.s32.totalorder %v541, 3
    %vm563 = vcmp.lt.s32.totalorder %v541, 4
    %v564 = vsel %vm560, %v544, %v547
    %v565 = vsel %vm563, %v553, 2102212464
    %v566 = vsel %vm562, %v550, %v565
    %v567 = vsel %vm561, %v564, %v566
    %v568 = vsel %vm560, %v547, %v550
    %v569 = vsel %vm563, %v556, 920167782
    %v570 = vsel %vm562, %v553, %v569
    %v571 = vsel %vm561, %v568, %v570
    %v572 = vsel %vm560, %v550, %v553
    %v573 = vsel %vm563, %v559, 1326507024
    %v574 = vsel %vm562, %v556, %v573
    %v575 = vsel %vm561, %v572, %v574
    %v576 = vshll.u32 %v536, 8
    %v577 = vmul.u32.u64.compose %v576, %v575
    %v578 = vextract.low.u32 %v577
    %v579 = vextract.high.u32 %v577
    %v580 = vmul.u32.u64.compose %v576, %v571
    %v581 = vextract.low.u32 %v580
    %v582 = vextract.high.u32 %v580
    %v583 = vmul.u32 %v576, %v567
    %v584 = vadd.s32 %v579, %v581
    %vm585 = vc.u32 %v579, %v581
    %v586 = vadd.s32 %v582, 1
    %v587 = vsel %vm585, %v586, %v582
    %v588 = vadd.s32 %v583, %v587
    %v589 = vadd.s32 %v588, 536870912
    %v590 = vshrl.u32 %v589, 30
    %v591 = vshll.u32 %v590, 30
    %v592 = vsub.s32 %v588, %v591
    %vm593 = vcmp.lt.s32.totalorder %v592, 0
    %v594 = vsub.s32 0, %v592
    %v595 = vsel %vm593, %v594, %v592
    %v596 = vclz %v595
    %v597 = vsub.s32 %v596, 2
    %vm598 = vcmp.gt.s32.totalorder 0, %v597
    %v599 = vsel %vm598, 0, %v597
    %v600 = vsub.s32 32, %v599
    %v601 = vshll.u32 %v592, %v599
    %v602 = vshrl.u32 %v584, %v600
    %v603 = vor.u32 %v601, %v602
    %v604 = vsub.s32 4294967266, %v599
    %v605 = vadd.s32 %v604, 127
    %v606 = vshll.u32 %v605, 23
    %v607 = vor.u32 4788187, %v606
    %v608 = vand.u32 2147483647, %v607
    %v610 = vcvt.s32.f32 %v603
    %v611 = vmul.f32 %v610, %v608
    %v612 = vxor.u32 %v611, 2147483648
    %v613 = vsel %vm530, %v612, %v611
    %v614 = vsub.s32 4, %v590
    %v615 = vsel %vm530, %v614, %v590
    %v616 = vsel %vm529, %v526, %v613
    %v617 = vsel %vm529, 0, %v615
    %v618 = vcosq.f32.pop %v616
    %v619 = vsinq.f32.pop %v616
    %vm620 = vweird.f32 %v526
    %v621 = vadd.s32 %v617, 3
    %v622 = vand.u32 %v621, 3
    %vm623 = vcmp.lt.s32.totalorder %v622, 2
    %vm624 = vcmp.eq.s32.totalorder %v622, 0
    %v625 = vxor.u32 %v619, 2147483648
    %v626 = vsel %vm624, %v618, %v625
    %vm627 = vcmp.eq.s32.totalorder %v622, 2
    %v628 = vxor.u32 %v618, 2147483648
    %v629 = vsel %vm627, %v628, %v619
    %v630 = vsel %vm623, %v626, %v629
    %v631 = vsel %vm620, nan, %v630
    %v632 = vand.u32 2147483647, %v527
    %vm633 = vcmp.le.f32.partialorder %v632, 0.7853982
    %vm634 = vcmp.lt.s32.totalorder %v527, 0
    %v635 = vand.u32 %v527, 2139095040
    %v636 = vshrl.u32 %v635, 23
    %v637 = vsub.s32 %v636, 127
    %v638 = vand.u32 2147483647, %v527
    %v639 = vand.u32 %v638, 8388607
    %v640 = vor.u32 %v639, 8388608
    %v641 = vsub.s32 0, %v640
    %v642 = vadd.s32 %v637, 1
    %vm643 = vcmp.gt.s32.totalorder %v642, 0
    %v644 = vsel %vm643, %v642, 0
    %v645 = vshrl.u32 %v644, 5
    %v646 = vand.u32 %v644, 31
    %v647 = vsub.s32 32, %v646
    %v648 = vshrl.u32 683565275, %v647
    %v649 = vshll.u32 683565275, %v646
    %v650 = vshrl.u32 2475754826, %v647
    %v651 = vor.u32 %v649, %v650
    %v652 = vshll.u32 2475754826, %v646
    %v653 = vshrl.u32 2131351028, %v647
    %v654 = vor.u32 %v652, %v653
    %v655 = vshll.u32 2131351028, %v646
    %v656 = vshrl.u32 2102212464, %v647
    %v657 = vor.u32 %v655, %v656
    %v658 = vshll.u32 2102212464, %v646
    %v659 = vshrl.u32 920167782, %v647
    %v660 = vor.u32 %v658, %v659
    %v661 = vshll.u32 920167782, %v646
    %v662 = vshrl.u32 1326507024, %v647
    %v663 = vor.u32 %v661, %v662
    %vm664 = vcmp.lt.s32.totalorder %v645, 1
    %vm665 = vcmp.lt.s32.totalorder %v645, 2
    %vm666 = vcmp.lt.s32.totalorder %v645, 3
    %vm667 = vcmp.lt.s32.totalorder %v645, 4
    %v668 = vsel %vm664, %v648, %v651
    %v669 = vsel %vm667, %v657, 2102212464
    %v670 = vsel %vm666, %v654, %v669
    %v671 = vsel %vm665, %v668, %v670
    %v672 = vsel %vm664, %v651, %v654
    %v673 = vsel %vm667, %v660, 920167782
    %v674 = vsel %vm666, %v657, %v673
    %v675 = vsel %vm665, %v672, %v674
    %v676 = vsel %vm664, %v654, %v657
    %v677 = vsel %vm667, %v663, 1326507024
    %v678 = vsel %vm666, %v660, %v677
    %v679 = vsel %vm665, %v676, %v678
    %v680 = vshll.u32 %v640, 8
    %v681 = vmul.u32.u64.compose %v680, %v679
    %v682 = vextract.low.u32 %v681
    %v683 = vextract.high.u32 %v681
    %v684 = vmul.u32.u64.compose %v680, %v675
    %v685 = vextract.low.u32 %v684
    %v686 = vextract.high.u32 %v684
    %v687 = vmul.u32 %v680, %v671
    %v688 = vadd.s32 %v683, %v685
    %vm689 = vc.u32 %v683, %v685
    %v690 = vadd.s32 %v686, 1
    %v691 = vsel %vm689, %v690, %v686
    %v692 = vadd.s32 %v687, %v691
    %v693 = vadd.s32 %v692, 536870912
    %v694 = vshrl.u32 %v693, 30
    %v695 = vshll.u32 %v694, 30
    %v696 = vsub.s32 %v692, %v695
    %vm697 = vcmp.lt.s32.totalorder %v696, 0
    %v698 = vsub.s32 0, %v696
    %v699 = vsel %vm697, %v698, %v696
    %v700 = vclz %v699
    %v701 = vsub.s32 %v700, 2
    %vm702 = vcmp.gt.s32.totalorder 0, %v701
    %v703 = vsel %vm702, 0, %v701
    %v704 = vsub.s32 32, %v703
    %v705 = vshll.u32 %v696, %v703
    %v706 = vshrl.u32 %v688, %v704
    %v707 = vor.u32 %v705, %v706
    %v708 = vsub.s32 4294967266, %v703
    %v709 = vadd.s32 %v708, 127
    %v710 = vshll.u32 %v709, 23
    %v711 = vor.u32 4788187, %v710
    %v712 = vand.u32 2147483647, %v711
    %v714 = vcvt.s32.f32 %v707
    %v715 = vmul.f32 %v714, %v712
    %v716 = vxor.u32 %v715, 2147483648
    %v717 = vsel %vm634, %v716, %v715
    %v718 = vsub.s32 4, %v694
    %v719 = vsel %vm634, %v718, %v694
    %v720 = vsel %vm633, %v527, %v717
    %v721 = vsel %vm633, 0, %v719
    %v722 = vcosq.f32.pop %v720
    %v723 = vsinq.f32.pop %v720
    %vm724 = vweird.f32 %v527
    %v725 = vadd.s32 %v721, 3
    %v726 = vand.u32 %v725, 3
    %vm727 = vcmp.lt.s32.totalorder %v726, 2
    %vm728 = vcmp.eq.s32.totalorder %v726, 0
    %v729 = vxor.u32 %v723, 2147483648
    %v730 = vsel %vm728, %v722, %v729
    %vm731 = vcmp.eq.s32.totalorder %v726, 2
    %v732 = vxor.u32 %v722, 2147483648
    %v733 = vsel %vm731, %v732, %v723
    %v734 = vsel %vm727, %v730, %v733
    %v735 = vsel %vm724, nan, %v734
    %v736 = vmul.f32 %v631, %v631
    %v737 = vmul.f32 %v735, %v735
    %738 = vrot.lane.b32.xlu0 %v520, 127
    %v739 = vpop.permute.xlu0 %738
    %740 = vrot.lane.b32.xlu0 %v521, 127
    %v741 = vpop.permute.xlu0 %740
    %v742 = vsel %vm289, %v739, %v741
    %v743 = vsel %vm289, %v741, %v739
    %v744 = vsel %vm65, %v742, %v522
    %v745 = vsel %vm66, %v743, %v523
    %v746 = vmul.f32 %v744, 0.017453292
    %v747 = vmul.f32 %v745, 0.017453292
    %v748 = vand.u32 2147483647, %v746
    %vm749 = vcmp.le.f32.partialorder %v748, 0.7853982
    %vm750 = vcmp.lt.s32.totalorder %v746, 0
    %v751 = vand.u32 %v746, 2139095040
    %v752 = vshrl.u32 %v751, 23
    %v753 = vsub.s32 %v752, 127
    %v754 = vand.u32 2147483647, %v746
    %v755 = vand.u32 %v754, 8388607
    %v756 = vor.u32 %v755, 8388608
    %v757 = vsub.s32 0, %v756
    %v758 = vadd.s32 %v753, 1
    %vm759 = vcmp.gt.s32.totalorder %v758, 0
    %v760 = vsel %vm759, %v758, 0
    %v761 = vshrl.u32 %v760, 5
    %v762 = vand.u32 %v760, 31
    %v763 = vsub.s32 32, %v762
    %v764 = vshrl.u32 683565275, %v763
    %v765 = vshll.u32 683565275, %v762
    %v766 = vshrl.u32 2475754826, %v763
    %v767 = vor.u32 %v765, %v766
    %v768 = vshll.u32 2475754826, %v762
    %v769 = vshrl.u32 2131351028, %v763
    %v770 = vor.u32 %v768, %v769
    %v771 = vshll.u32 2131351028, %v762
    %v772 = vshrl.u32 2102212464, %v763
    %v773 = vor.u32 %v771, %v772
    %v774 = vshll.u32 2102212464, %v762
    %v775 = vshrl.u32 920167782, %v763
    %v776 = vor.u32 %v774, %v775
    %v777 = vshll.u32 920167782, %v762
    %v778 = vshrl.u32 1326507024, %v763
    %v779 = vor.u32 %v777, %v778
    %vm780 = vcmp.lt.s32.totalorder %v761, 1
    %vm781 = vcmp.lt.s32.totalorder %v761, 2
    %vm782 = vcmp.lt.s32.totalorder %v761, 3
    %vm783 = vcmp.lt.s32.totalorder %v761, 4
    %v784 = vsel %vm780, %v764, %v767
    %v785 = vsel %vm783, %v773, 2102212464
    %v786 = vsel %vm782, %v770, %v785
    %v787 = vsel %vm781, %v784, %v786
    %v788 = vsel %vm780, %v767, %v770
    %v789 = vsel %vm783, %v776, 920167782
    %v790 = vsel %vm782, %v773, %v789
    %v791 = vsel %vm781, %v788, %v790
    %v792 = vsel %vm780, %v770, %v773
    %v793 = vsel %vm783, %v779, 1326507024
    %v794 = vsel %vm782, %v776, %v793
    %v795 = vsel %vm781, %v792, %v794
    %v796 = vshll.u32 %v756, 8
    %v797 = vmul.u32.u64.compose %v796, %v795
    %v798 = vextract.low.u32 %v797
    %v799 = vextract.high.u32 %v797
    %v800 = vmul.u32.u64.compose %v796, %v791
    %v801 = vextract.low.u32 %v800
    %v802 = vextract.high.u32 %v800
    %v803 = vmul.u32 %v796, %v787
    %v804 = vadd.s32 %v799, %v801
    %vm805 = vc.u32 %v799, %v801
    %v806 = vadd.s32 %v802, 1
    %v807 = vsel %vm805, %v806, %v802
    %v808 = vadd.s32 %v803, %v807
    %v809 = vadd.s32 %v808, 536870912
    %v810 = vshrl.u32 %v809, 30
    %v811 = vshll.u32 %v810, 30
    %v812 = vsub.s32 %v808, %v811
    %vm813 = vcmp.lt.s32.totalorder %v812, 0
    %v814 = vsub.s32 0, %v812
    %v815 = vsel %vm813, %v814, %v812
    %v816 = vclz %v815
    %v817 = vsub.s32 %v816, 2
    %vm818 = vcmp.gt.s32.totalorder 0, %v817
    %v819 = vsel %vm818, 0, %v817
    %v820 = vsub.s32 32, %v819
    %v821 = vshll.u32 %v812, %v819
    %v822 = vshrl.u32 %v804, %v820
    %v823 = vor.u32 %v821, %v822
    %v824 = vsub.s32 4294967266, %v819
    %v825 = vadd.s32 %v824, 127
    %v826 = vshll.u32 %v825, 23
    %v827 = vor.u32 4788187, %v826
    %v828 = vand.u32 2147483647, %v827
    %v830 = vcvt.s32.f32 %v823
    %v831 = vmul.f32 %v830, %v828
    %v832 = vxor.u32 %v831, 2147483648
    %v833 = vsel %vm750, %v832, %v831
    %v834 = vsub.s32 4, %v810
    %v835 = vsel %vm750, %v834, %v810
    %v836 = vsel %vm749, %v746, %v833
    %v837 = vsel %vm749, 0, %v835
    %v838 = vcosq.f32.pop %v836
    %v839 = vsinq.f32.pop %v836
    %vm840 = vweird.f32 %v746
    %v841 = vand.u32 %v837, 3
    %vm842 = vcmp.lt.s32.totalorder %v841, 2
    %vm843 = vcmp.eq.s32.totalorder %v841, 0
    %v844 = vxor.u32 %v839, 2147483648
    %v845 = vsel %vm843, %v838, %v844
    %vm846 = vcmp.eq.s32.totalorder %v841, 2
    %v847 = vxor.u32 %v838, 2147483648
    %v848 = vsel %vm846, %v847, %v839
    %v849 = vsel %vm842, %v845, %v848
    %v850 = vsel %vm840, nan, %v849
    %v851 = vand.u32 2147483647, %v747
    %vm852 = vcmp.le.f32.partialorder %v851, 0.7853982
    %vm853 = vcmp.lt.s32.totalorder %v747, 0
    %v854 = vand.u32 %v747, 2139095040
    %v855 = vshrl.u32 %v854, 23
    %v856 = vsub.s32 %v855, 127
    %v857 = vand.u32 2147483647, %v747
    %v858 = vand.u32 %v857, 8388607
    %v859 = vor.u32 %v858, 8388608
    %v860 = vsub.s32 0, %v859
    %v861 = vadd.s32 %v856, 1
    %vm862 = vcmp.gt.s32.totalorder %v861, 0
    %v863 = vsel %vm862, %v861, 0
    %v864 = vshrl.u32 %v863, 5
    %v865 = vand.u32 %v863, 31
    %v866 = vsub.s32 32, %v865
    %v867 = vshrl.u32 683565275, %v866
    %v868 = vshll.u32 683565275, %v865
    %v869 = vshrl.u32 2475754826, %v866
    %v870 = vor.u32 %v868, %v869
    %v871 = vshll.u32 2475754826, %v865
    %v872 = vshrl.u32 2131351028, %v866
    %v873 = vor.u32 %v871, %v872
    %v874 = vshll.u32 2131351028, %v865
    %v875 = vshrl.u32 2102212464, %v866
    %v876 = vor.u32 %v874, %v875
    %v877 = vshll.u32 2102212464, %v865
    %v878 = vshrl.u32 920167782, %v866
    %v879 = vor.u32 %v877, %v878
    %v880 = vshll.u32 920167782, %v865
    %v881 = vshrl.u32 1326507024, %v866
    %v882 = vor.u32 %v880, %v881
    %vm883 = vcmp.lt.s32.totalorder %v864, 1
    %vm884 = vcmp.lt.s32.totalorder %v864, 2
    %vm885 = vcmp.lt.s32.totalorder %v864, 3
    %vm886 = vcmp.lt.s32.totalorder %v864, 4
    %v887 = vsel %vm883, %v867, %v870
    %v888 = vsel %vm886, %v876, 2102212464
    %v889 = vsel %vm885, %v873, %v888
    %v890 = vsel %vm884, %v887, %v889
    %v891 = vsel %vm883, %v870, %v873
    %v892 = vsel %vm886, %v879, 920167782
    %v893 = vsel %vm885, %v876, %v892
    %v894 = vsel %vm884, %v891, %v893
    %v895 = vsel %vm883, %v873, %v876
    %v896 = vsel %vm886, %v882, 1326507024
    %v897 = vsel %vm885, %v879, %v896
    %v898 = vsel %vm884, %v895, %v897
    %v899 = vshll.u32 %v859, 8
    %v900 = vmul.u32.u64.compose %v899, %v898
    %v901 = vextract.low.u32 %v900
    %v902 = vextract.high.u32 %v900
    %v903 = vmul.u32.u64.compose %v899, %v894
    %v904 = vextract.low.u32 %v903
    %v905 = vextract.high.u32 %v903
    %v906 = vmul.u32 %v899, %v890
    %v907 = vadd.s32 %v902, %v904
    %vm908 = vc.u32 %v902, %v904
    %v909 = vadd.s32 %v905, 1
    %v910 = vsel %vm908, %v909, %v905
    %v911 = vadd.s32 %v906, %v910
    %v912 = vadd.s32 %v911, 536870912
    %v913 = vshrl.u32 %v912, 30
    %v914 = vshll.u32 %v913, 30
    %v915 = vsub.s32 %v911, %v914
    %vm916 = vcmp.lt.s32.totalorder %v915, 0
    %v917 = vsub.s32 0, %v915
    %v918 = vsel %vm916, %v917, %v915
    %v919 = vclz %v918
    %v920 = vsub.s32 %v919, 2
    %vm921 = vcmp.gt.s32.totalorder 0, %v920
    %v922 = vsel %vm921, 0, %v920
    %v923 = vsub.s32 32, %v922
    %v924 = vshll.u32 %v915, %v922
    %v925 = vshrl.u32 %v907, %v923
    %v926 = vor.u32 %v924, %v925
    %v927 = vsub.s32 4294967266, %v922
    %v928 = vadd.s32 %v927, 127
    %v929 = vshll.u32 %v928, 23
    %v930 = vor.u32 4788187, %v929
    %v931 = vand.u32 2147483647, %v930
    %v933 = vcvt.s32.f32 %v926
    %v934 = vmul.f32 %v933, %v931
    %v935 = vxor.u32 %v934, 2147483648
    %v936 = vsel %vm853, %v935, %v934
    %v937 = vsub.s32 4, %v913
    %v938 = vsel %vm853, %v937, %v913
    %v939 = vsel %vm852, %v747, %v936
    %v940 = vsel %vm852, 0, %v938
    %v941 = vcosq.f32.pop %v939
    %v942 = vsinq.f32.pop %v939
    %vm943 = vweird.f32 %v747
    %v944 = vand.u32 %v940, 3
    %vm945 = vcmp.lt.s32.totalorder %v944, 2
    %vm946 = vcmp.eq.s32.totalorder %v944, 0
    %v947 = vxor.u32 %v942, 2147483648
    %v948 = vsel %vm946, %v941, %v947
    %vm949 = vcmp.eq.s32.totalorder %v944, 2
    %v950 = vxor.u32 %v941, 2147483648
    %v951 = vsel %vm949, %v950, %v942
    %v952 = vsel %vm945, %v948, %v951
    %v953 = vsel %vm943, nan, %v952
    %954 = vrot.lane.b32.xlu0 %v850, 127
    %v955 = vpop.permute.xlu0 %954
    %956 = vrot.lane.b32.xlu0 %v953, 127
    %v957 = vpop.permute.xlu0 %956
    %v958 = vsel %vm289, %v955, %v957
    %v959 = vsel %vm289, %v957, %v955
    %v960 = vmul.f32 %v850, %v958
    %v961 = vmul.f32 %v953, %v959
    %962 = vrot.lane.b32.xlu0 %v736, 127
    %v963 = vpop.permute.xlu0 %962
    %964 = vrot.lane.b32.xlu0 %v737, 127
    %v965 = vpop.permute.xlu0 %964
    %v966 = vsel %vm289, %v963, %v965
    %v967 = vsel %vm289, %v965, %v963
    %v968 = vmul.f32 %v960, %v736
    %v969 = vmul.f32 %v961, %v737
    %v970 = vadd.f32 %v966, %v968
    %v971 = vadd.f32 %v967, %v969
    %972 = vrot.lane.b32.xlu0 %v970, 1
    %v973 = vpop.permute.xlu0 %972
    %974 = vrot.lane.b32.xlu0 %v971, 1
    %v975 = vpop.permute.xlu0 %974
    %vm976 = vcmp.lt.s32.totalorder %v61, 1
    %v977 = vsel %vm976, %v973, %v975
    %v978 = vsel %vm976, %v975, %v973
    %v979 = vsel %vm65, %v518, %v978
    %v980 = vsel %vm66, %v519, %v977
    %v981 = vmax.f32 %v979, 0.0
    %v982 = vmax.f32 %v980, 0.0
    %v983 = vmin.f32 %v981, 1.0
    %v984 = vmin.f32 %v982, 1.0
    %v985 = vrsqrt.pop %v983
    %v986 = vmul.f32 %v983, %v985
    %vm987 = vcmp.eq.f32.partialorder %v983, inf
    %v988 = vsel %vm987, %v983, %v986
    %vm989 = vcmp.eq.f32.partialorder %v983, 0.0
    %v990 = vand.u32 %v983, 2147483648
    %v991 = vsel %vm989, %v990, %v988
    %v992 = vrsqrt.pop %v984
    %v993 = vmul.f32 %v984, %v992
    %vm994 = vcmp.eq.f32.partialorder %v984, inf
    %v995 = vsel %vm994, %v984, %v993
    %vm996 = vcmp.eq.f32.partialorder %v984, 0.0
    %v997 = vand.u32 %v984, 2147483648
    %v998 = vsel %vm996, %v997, %v995
    %v999 = vsub.f32 1.0, %v983
    %v1000 = vsub.f32 1.0, %v984
    %v1001 = vrsqrt.pop %v999
    %v1002 = vmul.f32 %v999, %v1001
    %vm1003 = vcmp.eq.f32.partialorder %v999, inf
    %v1004 = vsel %vm1003, %v999, %v1002
    %vm1005 = vcmp.eq.f32.partialorder %v999, 0.0
    %v1006 = vand.u32 %v999, 2147483648
    %v1007 = vsel %vm1005, %v1006, %v1004
    %v1008 = vrsqrt.pop %v1000
    %v1009 = vmul.f32 %v1000, %v1008
    %vm1010 = vcmp.eq.f32.partialorder %v1000, inf
    %v1011 = vsel %vm1010, %v1000, %v1009
    %vm1012 = vcmp.eq.f32.partialorder %v1000, 0.0
    %v1013 = vand.u32 %v1000, 2147483648
    %v1014 = vsel %vm1012, %v1013, %v1011
    %v1015 = vand.u32 2147483647, %v1007
    %v1016 = vand.u32 2147483647, %v991
    %v1017 = vmin.f32 %v1015, %v1016
    %v1018 = vmax.f32 %v1015, %v1016
    %v1019 = vrcp.pop %v1018
    %v1020 = vmul.f32 %v1017, %v1019
    %v1021 = vmul.f32 %v1020, %v1020
    %v1022 = vmul.f32 0.002785687, %v1021
    %v1023 = vadd.f32 %v1022, -0.015866
    %v1024 = vmul.f32 %v1023, %v1021
    %v1025 = vadd.f32 %v1024, 0.04247222
    %v1026 = vmul.f32 %v1025, %v1021
    %v1027 = vadd.f32 %v1026, -0.074975304
    %v1028 = vmul.f32 %v1027, %v1021
    %v1029 = vadd.f32 %v1028, 0.1064488
    %v1030 = vmul.f32 %v1029, %v1021
    %v1031 = vadd.f32 %v1030, -0.14207031
    %v1032 = vmul.f32 %v1031, %v1021
    %v1033 = vadd.f32 %v1032, 0.19993454
    %v1034 = vmul.f32 %v1033, %v1021
    %v1035 = vadd.f32 %v1034, -0.33333147
    %v1036 = vmul.f32 %v1035, %v1021
    %v1037 = vmul.f32 %v1036, %v1020
    %v1038 = vadd.f32 %v1037, %v1020
    %vm1039 = vcmp.gt.f32.partialorder %v1016, %v1015
    %v1040 = vsub.f32 1.5707964, %v1038
    %v1041 = vsel %vm1039, %v1040, %v1038
    %vm1042 = vcmp.lt.f32.partialorder %v1007, 0.0
    %v1043 = vsub.f32 3.1415927, %v1041
    %v1044 = vsel %vm1042, %v1043, %v1041
    %vm1045 = vcmp.lt.s32.totalorder %v1007, 0
    %v1046 = vsel %vm1045, 3.1415927, 0.0
    %vm1047 = vcmp.eq.f32.partialorder %v991, 0.0
    %v1048 = vsel %vm1047, %v1046, %v1044
    %vm1049 = vcmp.ne.f32.partialorder %v1007, %v1007
    %vm1050 = vcmp.ne.f32.partialorder %v991, %v991
    %vm1051 = vmor %vm1049, %vm1050
    %v1052 = vsel %vm1051, nan, %v1048
    %vm1053 = vcmp.lt.f32.partialorder %v1007, 0.0
    %v1054 = vsel %vm1053, 2.3561945, 0.7853982
    %vm1055 = vcmp.eq.s32.totalorder %v1015, inf
    %vm1056 = vcmp.eq.s32.totalorder %v1016, inf
    %vm1057 = vmand %vm1055, %vm1056
    %v1058 = vsel %vm1057, %v1054, %v1052
    %v1059 = vand.u32 2147483647, %v1058
    %v1060 = vand.u32 %v991, 2147483648
    %v1061 = vor.u32 %v1059, %v1060
    %v1062 = vand.u32 2147483647, %v1014
    %v1063 = vand.u32 2147483647, %v998
    %v1064 = vmin.f32 %v1062, %v1063
    %v1065 = vmax.f32 %v1062, %v1063
    %v1066 = vrcp.pop %v1065
    %v1067 = vmul.f32 %v1064, %v1066
    %v1068 = vmul.f32 %v1067, %v1067
    %v1069 = vmul.f32 0.002785687, %v1068
    %v1070 = vadd.f32 %v1069, -0.015866
    %v1071 = vmul.f32 %v1070, %v1068
    %v1072 = vadd.f32 %v1071, 0.04247222
    %v1073 = vmul.f32 %v1072, %v1068
    %v1074 = vadd.f32 %v1073, -0.074975304
    %v1075 = vmul.f32 %v1074, %v1068
    %v1076 = vadd.f32 %v1075, 0.1064488
    %v1077 = vmul.f32 %v1076, %v1068
    %v1078 = vadd.f32 %v1077, -0.14207031
    %v1079 = vmul.f32 %v1078, %v1068
    %v1080 = vadd.f32 %v1079, 0.19993454
    %v1081 = vmul.f32 %v1080, %v1068
    %v1082 = vadd.f32 %v1081, -0.33333147
    %v1083 = vmul.f32 %v1082, %v1068
    %v1084 = vmul.f32 %v1083, %v1067
    %v1085 = vadd.f32 %v1084, %v1067
    %vm1086 = vcmp.gt.f32.partialorder %v1063, %v1062
    %v1087 = vsub.f32 1.5707964, %v1085
    %v1088 = vsel %vm1086, %v1087, %v1085
    %vm1089 = vcmp.lt.f32.partialorder %v1014, 0.0
    %v1090 = vsub.f32 3.1415927, %v1088
    %v1091 = vsel %vm1089, %v1090, %v1088
    %vm1092 = vcmp.lt.s32.totalorder %v1014, 0
    %v1093 = vsel %vm1092, 3.1415927, 0.0
    %vm1094 = vcmp.eq.f32.partialorder %v998, 0.0
    %v1095 = vsel %vm1094, %v1093, %v1091
    %vm1096 = vcmp.ne.f32.partialorder %v1014, %v1014
    %vm1097 = vcmp.ne.f32.partialorder %v998, %v998
    %vm1098 = vmor %vm1096, %vm1097
    %v1099 = vsel %vm1098, nan, %v1095
    %vm1100 = vcmp.lt.f32.partialorder %v1014, 0.0
    %v1101 = vsel %vm1100, 2.3561945, 0.7853982
    %vm1102 = vcmp.eq.s32.totalorder %v1062, inf
    %vm1103 = vcmp.eq.s32.totalorder %v1063, inf
    %vm1104 = vmand %vm1102, %vm1103
    %v1105 = vsel %vm1104, %v1101, %v1099
    %v1106 = vand.u32 2147483647, %v1105
    %v1107 = vand.u32 %v998, 2147483648
    %v1108 = vor.u32 %v1106, %v1107
    %v1109 = vld [vmem:[#allocation2] sm:$0xff]
    %v1110 = vld [vmem:[#allocation2 + $0x8] sm:$0xff]
    %v1111 = vadd.f32 %v1061, 0.0
    %v1112 = vadd.f32 %v1108, 0.0
    %v1113 = vadd.f32 %v1109, %v1111
    %v1114 = vadd.f32 %v1110, %v1112
    %1115 = vst [vmem:[#allocation2] sm:$0xff] %v1113
    %1116 = vst [vmem:[#allocation2 + $0x8] sm:$0xff] %v1114
    // Predicated region
    $region22: #{tpu_custom_call.1} parent=1 // pred_check
      %p1117 = pneg %p54
    $region23: #{tpu_custom_call.1} parent=1 // pred_check_branch
      %1119 = sbr.rel (%p1117) target = $region25
    $region24: #{tpu_custom_call.1} parent=1 // pred_region
      %v1120 = vld [vmem:[#allocation2] sm:$0xff]
      %v1121 = vld [vmem:[#allocation2 + $0x8] sm:$0xff]
      %v1122 = vadd.f32 %v1120, %v1121
      %1123 = vadd.xlane.f32.xlu0 %v1122
      %v1124 = vpop.xlane.xlu0 %1123
      %v1125 = vrot.slane %v1124, 4
      %v1126 = vadd.f32 %v1124, %v1125
      %v1127 = vrot.slane %v1126, 2
      %v1128 = vadd.f32 %v1126, %v1127
      %v1129 = vrot.slane %v1128, 1
      %v1130 = vadd.f32 %v1128, %v1129
      %s1131 = vtos %v1130
      %s1132 = scalar_lea.smem [#allocation8], 0
      %1133 = sst [smem:[%s1132]] %s1131
    $region25: #{tpu_custom_call.1} parent=1 // pred_fallthru
      _
    // Predicated region
    $region26: #{tpu_custom_call.1} parent=1 // pred_check
      _
    $region27: #{tpu_custom_call.1} parent=1 // pred_check_branch
      %1135 = sbr.rel (0) target = $region29
    $region28: #{tpu_custom_call.1} parent=1 // pred_region
      %s1137 = ssub.s32 16, 16
      %1138 = vsyncadd [#allocation5], %s1137
      %1141 = dma.smem_to_hbm [#allocation8], 16, %s2, [#allocation5]
    $region29: #{tpu_custom_call.1} parent=1 // pred_fallthru
      _
    // Predicated region
    $region30: #{tpu_custom_call.1} parent=1 // pred_check
      _
    $region31: #{tpu_custom_call.1} parent=1 // pred_check_branch
      %1143 = sbr.rel (0) target = $region33
    $region32: #{tpu_custom_call.1} parent=1 // pred_region
      %1144 = dma.done [#allocation5], 16
    $region33: #{tpu_custom_call.1} parent=1 // pred_fallthru
      _
    %1145 = sfence
    %1146 = vsyncpa [#allocation4], 1
    %1147 = vsyncpa [#allocation7], 1
    %1148 = vsyncpa [#allocation5], 1

</llo_original>
